<compile_context>
chip_gen: v7x
topology: tpu7x:2x2x1
jax: 0.10.0
libtpu: 0.0.40
codegen_flags: <defaults>
</compile_context>

<pallas_src>
import math

import jax
import jax.numpy as jnp
from jax.experimental import pallas as pl
from jax.experimental.pallas import tpu as pltpu


def _round_up(v: int, m: int) -> int:
    return ((v + m - 1) // m) * m


def _cdiv(a: int, b: int) -> int:
    return -(-a // b)


# ---------------------------------------------------------------------------
# Kernel
# ---------------------------------------------------------------------------

def _fast_mish(v):
    """mish(v) = v * tanh(softplus(v)), single-transcendental rewrite.

    tanh(log1p(e)) = e*(e+2) / (e*(e+2) + 2) with e = exp(v); the division is an
    approximate EUP reciprocal (separate issue slot -> nearly free).  For
    v > 20, tanh(softplus(v)) == 1 in f32, so return v directly; exp input is
    clamped so the unused branch never overflows to inf/NaN.
    """
    e = jnp.exp(jnp.minimum(v, 20.0))
    t = e * (e + 2.0)
    m = v * t * pl.reciprocal(t + 2.0, approx=True)
    return jnp.where(v > 20.0, v, m)


def _make_mlp_kernel(act_flags):
    """Fused kernel: len(act_flags) layers back-to-back, h never touches HBM.

    act_flags[i] == True -> apply Mish after layer i (hidden layer).
    Matmuls take bf16 operands with f32 accumulation; bias add + activation in
    f32 (safe on v5e's f32-only VPU/EUP), cast back to bf16 for the next MXU
    pass.
    """
    n = len(act_flags)

    def kernel(x_ref, *refs):
        w_refs = refs[:n]
        b_refs = refs[n:2 * n]
        o_ref = refs[2 * n]

        h = x_ref[...]                      # bf16 [tile_m, P_in]
        for i in range(n):
            acc = jnp.dot(h, w_refs[i][...], preferred_element_type=jnp.float32)
            acc = acc + b_refs[i][...]      # (1, P) f32 broadcast
            if act_flags[i]:
                acc = _fast_mish(acc)
            if i < n - 1:
                h = acc.astype(jnp.bfloat16)
            else:
                o_ref[...] = acc.astype(o_ref.dtype)

    return kernel


# ---------------------------------------------------------------------------
# Wrapper
# ---------------------------------------------------------------------------

def _pick_vmem_limit() -> int:
    """~3/4 of physical per-core VMEM, capped at 100 MiB (48 MiB on v7x)."""
    cap = 64 * 1024 * 1024
    try:
        info = pltpu.get_tpu_info()
        cap = int(getattr(info, "vmem_capacity_bytes", cap) or cap)
    except Exception:
        pass
    return min((cap * 3) // 4, 100 * 1024 * 1024)


def _group_layers(pdims, tile_m, vmem_limit):
    """Greedily group consecutive layers whose resident weights fit VMEM."""
    budget = int(vmem_limit * 0.6)
    # x/out tiles are double-buffered by the pipeline.
    fixed = 2 * tile_m * max(pdims) * (2 + 4)
    groups, cur, cur_bytes = [], [], 0
    for i in range(len(pdims) - 1):
        layer_bytes = 2 * (pdims[i] * pdims[i + 1] * 2 + pdims[i + 1] * 4)
        if cur and (cur_bytes + layer_bytes + fixed) > budget:
            groups.append(cur)
            cur, cur_bytes = [], 0
        cur.append(i)
        cur_bytes += layer_bytes
    groups.append(cur)
    return groups


def _fused_call(x_p, ws, bs, act_flags, tile_m, out_dtype, vmem_limit,
                single_buffer_consts):
    n = len(ws)
    M_pad, pin = x_p.shape
    pout = ws[-1].shape[1]
    grid = (M_pad // tile_m,)

    const_kwargs = {}
    if single_buffer_consts and hasattr(pl, "Buffered"):
        # Constant blocks (index_map always (0,0)) don't need double-buffering.
        const_kwargs = {"pipeline_mode": pl.Buffered(1)}

    in_specs = [pl.BlockSpec((tile_m, pin), lambda i: (i, 0))]
    in_specs += [
        pl.BlockSpec((w.shape[0], w.shape[1]), lambda i: (0, 0), **const_kwargs)
        for w in ws
    ]
    in_specs += [
        pl.BlockSpec((1, b.shape[1]), lambda i: (0, 0), **const_kwargs)
        for b in bs
    ]
    out_spec = pl.BlockSpec((tile_m, pout), lambda i: (i, 0))

    return pl.pallas_call(
        _make_mlp_kernel(act_flags),
        out_shape=jax.ShapeDtypeStruct((M_pad, pout), out_dtype),
        grid=grid,
        in_specs=in_specs,
        out_specs=out_spec,
        compiler_params=pltpu.CompilerParams(
            dimension_semantics=("parallel",),   # batch tiles shard on v7x TCs
            vmem_limit_bytes=int(vmem_limit),
        ),
    )(x_p, *ws, *bs)


def _run_group(x_p, ws, bs, act_flags, tile_m, out_dtype, vmem_limit):
    try:
        return _fused_call(x_p, ws, bs, act_flags, tile_m, out_dtype,
                           vmem_limit, single_buffer_consts=True)
    except Exception:
        # Older JAX without BlockSpec pipeline_mode / pl.Buffered support.
        return _fused_call(x_p, ws, bs, act_flags, tile_m, out_dtype,
                           vmem_limit, single_buffer_consts=False)


def prepare_mlp_params(params):
    """Pad/cast weights once (cache the result; do NOT call per forward).

    params: list of (w [in_dim, out_dim] f32, b [1, out_dim] f32).
    Feature dims are zero-padded to multiples of 128 so every matmul is
    lane-dense; padded columns/rows are zero and Mish(0) == 0, so padded lanes
    stay exactly zero through all layers.
    """
    dims = [params[0][0].shape[0]] + [w.shape[1] for (w, _) in params]
    pdims = [_round_up(d, 128) for d in dims]
    ws, bs = [], []
    for i, (w, b) in enumerate(params):
        wp = jnp.zeros((pdims[i], pdims[i + 1]), jnp.bfloat16)
        wp = wp.at[: w.shape[0], : w.shape[1]].set(w.astype(jnp.bfloat16))
        bp = jnp.zeros((1, pdims[i + 1]), jnp.float32)
        bp = bp.at[:, : w.shape[1]].set(b.reshape(1, -1).astype(jnp.float32))
        ws.append(wp)
        bs.append(bp)
    return {"dims": dims, "pdims": pdims, "ws": ws, "bs": bs}


def mlp_forward(x, prepared):
    """Fused MLP forward.  x: [M, features[0]] f32 -> [M, features[-1]] f32."""
    dims, pdims = prepared["dims"], prepared["pdims"]
    ws, bs = prepared["ws"], prepared["bs"]
    n_layers = len(ws)

    M, K0 = x.shape
    assert K0 == dims[0]

    # Adaptive batch tile: <= 256 rows, minimal row padding, and >= 2 grid
    # steps once the batch exceeds one tile (keeps both v7x TCs busy).
    M8 = _round_up(M, 8)
    n_tiles = _cdiv(M8, 256)
    tile_m = _round_up(_cdiv(M8, n_tiles), 8)
    M_pad = n_tiles * tile_m

    x_p = jnp.zeros((M_pad, pdims[0]), jnp.bfloat16)
    x_p = x_p.at[:M, :K0].set(x.astype(jnp.bfloat16))

    vmem_limit = _pick_vmem_limit()
    groups = _group_layers(pdims, tile_m, vmem_limit)

    h = x_p
    y = None
    for gi, g in enumerate(groups):
        last_group = gi == len(groups) - 1
        act_flags = tuple(layer < n_layers - 1 for layer in g)
        out_dtype = jnp.float32 if last_group else jnp.bfloat16
        y = _run_group(h, [ws[j] for j in g], [bs[j] for j in g],
                       act_flags, tile_m, out_dtype, vmem_limit)
        if not last_group:
            h = y   # bf16, already lane-padded; feeds the next group directly

    return y[:M, : dims[-1]]


# ---------------------------------------------------------------------------
# Init + reference
# ---------------------------------------------------------------------------

def init_mlp_params(key, features):
    """nn.Linear-style init (U[-1/sqrt(in), 1/sqrt(in)]); w is [in, out]."""
    params = []
    for i in range(1, len(features)):
        fan_in, fan_out = features[i - 1], features[i]
        key, kw, kb = jax.random.split(key, 3)
        bound = 1.0 / math.sqrt(fan_in)
        w = jax.random.uniform(kw, (fan_in, fan_out), jnp.float32,
                               minval=-bound, maxval=bound)
        b = jax.random.uniform(kb, (1, fan_out), jnp.float32,
                               minval=-bound, maxval=bound)
        params.append((w, b))
    return params


def mlp_reference(x, params):
    """Pure-JAX reference with the same bf16 quantization as the kernel
    (f32 accumulation, exact f32 mish = x*tanh(softplus(x)))."""
    h = x.astype(jnp.bfloat16).astype(jnp.float32)
    n_layers = len(params)
    for i, (w, b) in enumerate(params):
        wq = w.astype(jnp.bfloat16).astype(jnp.float32)
        h = h @ wq + b.reshape(1, -1)
        if i < n_layers - 1:
            h = h * jnp.tanh(jax.nn.softplus(h))
            h = h.astype(jnp.bfloat16).astype(jnp.float32)
    return h


if __name__ == "__main__":
    key = jax.random.PRNGKey(0)
    features = [32, 64, 48, 16]     # input dim, two hidden layers, output dim
    batch = 8

    kx, kp = jax.random.split(key)
    x = jax.random.normal(kx, (batch, features[0]), jnp.float32)
    params = init_mlp_params(kp, features)
    prepared = prepare_mlp_params(params)   # pad/cast once, reuse across calls

    y = jax.block_until_ready(mlp_forward(x, prepared))
    y_ref = mlp_reference(x, params)

    assert y.shape == (batch, features[-1])
    max_err = float(jnp.max(jnp.abs(y - y_ref)))
    assert jnp.allclose(y, y_ref, atol=2e-2, rtol=2e-2), max_err
    print("KERNEL_OK")
</pallas_src>

<mosaic_0001>
module attributes {stable_mosaic.version = 11 : i64} {
  func.func @kernel(%arg0: i32, %arg1: memref<8x128xbf16, #tpu.memory_space<vmem>>, %arg2: memref<128x128xbf16, #tpu.memory_space<vmem>>, %arg3: memref<128x128xbf16, #tpu.memory_space<vmem>>, %arg4: memref<128x128xbf16, #tpu.memory_space<vmem>>, %arg5: memref<1x128xf32, #tpu.memory_space<vmem>>, %arg6: memref<1x128xf32, #tpu.memory_space<vmem>>, %arg7: memref<1x128xf32, #tpu.memory_space<vmem>>, %arg8: memref<8x128xf32, #tpu.memory_space<vmem>>) attributes {dimension_semantics = [#tpu.dimension_semantics<parallel>], iteration_bounds = array<i64: 1>, scalar_prefetch = 0 : i64, scratch_operands = 0 : i64, tpu.core_type = #tpu.core_type<tc>, window_params = [{transform_indices = @transform_0, window_bounds = array<i64: 8, 128>}, {pipeline_mode = #tpu.pipeline_mode<synchronous>, transform_indices = @transform_1, window_bounds = array<i64: 128, 128>}, {pipeline_mode = #tpu.pipeline_mode<synchronous>, transform_indices = @transform_2, window_bounds = array<i64: 128, 128>}, {pipeline_mode = #tpu.pipeline_mode<synchronous>, transform_indices = @transform_3, window_bounds = array<i64: 128, 128>}, {pipeline_mode = #tpu.pipeline_mode<synchronous>, transform_indices = @transform_4, window_bounds = array<i64: 1, 128>}, {pipeline_mode = #tpu.pipeline_mode<synchronous>, transform_indices = @transform_5, window_bounds = array<i64: 1, 128>}, {pipeline_mode = #tpu.pipeline_mode<synchronous>, transform_indices = @transform_6, window_bounds = array<i64: 1, 128>}, {transform_indices = @transform_7, window_bounds = array<i64: 8, 128>}]} {
    %c0 = arith.constant 0 : index
    %c0_0 = arith.constant 0 : index
    %0 = vector.load %arg1[%c0, %c0_0] : memref<8x128xbf16, #tpu.memory_space<vmem>>, vector<8x128xbf16>
    %c0_1 = arith.constant 0 : index
    %c0_2 = arith.constant 0 : index
    %1 = vector.load %arg2[%c0_1, %c0_2] : memref<128x128xbf16, #tpu.memory_space<vmem>>, vector<128x128xbf16>
    %cst = arith.constant dense<0.000000e+00> : vector<8x128xf32>
    %2 = tpu.matmul %0, %1, %cst {dimension_numbers = #tpu.dot_dimension_numbers<[1], [0], [0], [1], [0, 0, 1, 1], [], []>} : vector<8x128xbf16>, vector<128x128xbf16>, vector<8x128xf32> -> vector<8x128xf32>
    %c0_3 = arith.constant 0 : index
    %c0_4 = arith.constant 0 : index
    %3 = vector.load %arg5[%c0_3, %c0_4] : memref<1x128xf32, #tpu.memory_space<vmem>>, vector<1x128xf32>
    %4 = vector.broadcast %3 : vector<1x128xf32> to vector<8x128xf32>
    %5 = arith.addf %2, %4 : vector<8x128xf32>
    %cst_5 = arith.constant 2.000000e+01 : f32
    %6 = vector.broadcast %cst_5 : f32 to vector<8x128xf32>
    %7 = arith.minimumf %5, %6 : vector<8x128xf32>
    %8 = math.exp %7 : vector<8x128xf32>
    %cst_6 = arith.constant 2.000000e+00 : f32
    %9 = vector.broadcast %cst_6 : f32 to vector<8x128xf32>
    %10 = arith.addf %8, %9 : vector<8x128xf32>
    %11 = arith.mulf %8, %10 : vector<8x128xf32>
    %12 = arith.mulf %5, %11 : vector<8x128xf32>
    %cst_7 = arith.constant 2.000000e+00 : f32
    %13 = vector.broadcast %cst_7 : f32 to vector<8x128xf32>
    %14 = arith.addf %11, %13 : vector<8x128xf32>
    %15 = tpu.reciprocal %14 {approx = true} : vector<8x128xf32> -> vector<8x128xf32>
    %16 = arith.mulf %12, %15 : vector<8x128xf32>
    %cst_8 = arith.constant 2.000000e+01 : f32
    %17 = vector.broadcast %cst_8 : f32 to vector<8x128xf32>
    %18 = arith.cmpf ogt, %5, %17 : vector<8x128xf32>
    %19 = arith.select %18, %5, %16 : vector<8x128xi1>, vector<8x128xf32>
    %20 = arith.truncf %19 : vector<8x128xf32> to vector<8x128xbf16>
    %c0_9 = arith.constant 0 : index
    %c0_10 = arith.constant 0 : index
    %21 = vector.load %arg3[%c0_9, %c0_10] : memref<128x128xbf16, #tpu.memory_space<vmem>>, vector<128x128xbf16>
    %cst_11 = arith.constant dense<0.000000e+00> : vector<8x128xf32>
    %22 = tpu.matmul %20, %21, %cst_11 {dimension_numbers = #tpu.dot_dimension_numbers<[1], [0], [0], [1], [0, 0, 1, 1], [], []>} : vector<8x128xbf16>, vector<128x128xbf16>, vector<8x128xf32> -> vector<8x128xf32>
    %c0_12 = arith.constant 0 : index
    %c0_13 = arith.constant 0 : index
    %23 = vector.load %arg6[%c0_12, %c0_13] : memref<1x128xf32, #tpu.memory_space<vmem>>, vector<1x128xf32>
    %24 = vector.broadcast %23 : vector<1x128xf32> to vector<8x128xf32>
    %25 = arith.addf %22, %24 : vector<8x128xf32>
    %cst_14 = arith.constant 2.000000e+01 : f32
    %26 = vector.broadcast %cst_14 : f32 to vector<8x128xf32>
    %27 = arith.minimumf %25, %26 : vector<8x128xf32>
    %28 = math.exp %27 : vector<8x128xf32>
    %cst_15 = arith.constant 2.000000e+00 : f32
    %29 = vector.broadcast %cst_15 : f32 to vector<8x128xf32>
    %30 = arith.addf %28, %29 : vector<8x128xf32>
    %31 = arith.mulf %28, %30 : vector<8x128xf32>
    %32 = arith.mulf %25, %31 : vector<8x128xf32>
    %cst_16 = arith.constant 2.000000e+00 : f32
    %33 = vector.broadcast %cst_16 : f32 to vector<8x128xf32>
    %34 = arith.addf %31, %33 : vector<8x128xf32>
    %35 = tpu.reciprocal %34 {approx = true} : vector<8x128xf32> -> vector<8x128xf32>
    %36 = arith.mulf %32, %35 : vector<8x128xf32>
    %cst_17 = arith.constant 2.000000e+01 : f32
    %37 = vector.broadcast %cst_17 : f32 to vector<8x128xf32>
    %38 = arith.cmpf ogt, %25, %37 : vector<8x128xf32>
    %39 = arith.select %38, %25, %36 : vector<8x128xi1>, vector<8x128xf32>
    %40 = arith.truncf %39 : vector<8x128xf32> to vector<8x128xbf16>
    %c0_18 = arith.constant 0 : index
    %c0_19 = arith.constant 0 : index
    %41 = vector.load %arg4[%c0_18, %c0_19] : memref<128x128xbf16, #tpu.memory_space<vmem>>, vector<128x128xbf16>
    %cst_20 = arith.constant dense<0.000000e+00> : vector<8x128xf32>
    %42 = tpu.matmul %40, %41, %cst_20 {dimension_numbers = #tpu.dot_dimension_numbers<[1], [0], [0], [1], [0, 0, 1, 1], [], []>} : vector<8x128xbf16>, vector<128x128xbf16>, vector<8x128xf32> -> vector<8x128xf32>
    %c0_21 = arith.constant 0 : index
    %c0_22 = arith.constant 0 : index
    %43 = vector.load %arg7[%c0_21, %c0_22] : memref<1x128xf32, #tpu.memory_space<vmem>>, vector<1x128xf32>
    %44 = vector.broadcast %43 : vector<1x128xf32> to vector<8x128xf32>
    %45 = arith.addf %42, %44 : vector<8x128xf32>
    %c0_23 = arith.constant 0 : index
    %c0_24 = arith.constant 0 : index
    %46 = vector.load %arg8[%c0_23, %c0_24] : memref<8x128xf32, #tpu.memory_space<vmem>>, vector<8x128xf32>
    tpu.vector_store %arg8[%c0_23, %c0_24], %45 {strides = array<i32>} : memref<8x128xf32, #tpu.memory_space<vmem>>, vector<8x128xf32>,
    return
  }
  func.func @transform_0(%arg0: i32) -> (i32, i32) {
    %c0_i32 = arith.constant 0 : i32
    %c0_i32_0 = arith.constant 0 : i32
    return %arg0, %c0_i32 : i32, i32
  }
  func.func @transform_1(%arg0: i32) -> (i32, i32) {
    %c0_i32 = arith.constant 0 : i32
    %c0_i32_0 = arith.constant 0 : i32
    %c0_i32_1 = arith.constant 0 : i32
    return %c0_i32, %c0_i32_0 : i32, i32
  }
  func.func @transform_2(%arg0: i32) -> (i32, i32) {
    %c0_i32 = arith.constant 0 : i32
    %c0_i32_0 = arith.constant 0 : i32
    %c0_i32_1 = arith.constant 0 : i32
    return %c0_i32, %c0_i32_0 : i32, i32
  }
  func.func @transform_3(%arg0: i32) -> (i32, i32) {
    %c0_i32 = arith.constant 0 : i32
    %c0_i32_0 = arith.constant 0 : i32
    %c0_i32_1 = arith.constant 0 : i32
    return %c0_i32, %c0_i32_0 : i32, i32
  }
  func.func @transform_4(%arg0: i32) -> (i32, i32) {
    %c0_i32 = arith.constant 0 : i32
    %c0_i32_0 = arith.constant 0 : i32
    %c0_i32_1 = arith.constant 0 : i32
    return %c0_i32, %c0_i32_0 : i32, i32
  }
  func.func @transform_5(%arg0: i32) -> (i32, i32) {
    %c0_i32 = arith.constant 0 : i32
    %c0_i32_0 = arith.constant 0 : i32
    %c0_i32_1 = arith.constant 0 : i32
    return %c0_i32, %c0_i32_0 : i32, i32
  }
  func.func @transform_6(%arg0: i32) -> (i32, i32) {
    %c0_i32 = arith.constant 0 : i32
    %c0_i32_0 = arith.constant 0 : i32
    %c0_i32_1 = arith.constant 0 : i32
    return %c0_i32, %c0_i32_0 : i32, i32
  }
  func.func @transform_7(%arg0: i32) -> (i32, i32) {
    %c0_i32 = arith.constant 0 : i32
    %c0_i32_0 = arith.constant 0 : i32
    return %arg0, %c0_i32 : i32, i32
  }
}

module attributes {stable_mosaic.version = 11 : i64} {
  func.func @kernel(%arg0: i32, %arg1: memref<8x128xbf16, #tpu.memory_space<vmem>>, %arg2: memref<128x128xbf16, #tpu.memory_space<vmem>>, %arg3: memref<128x128xbf16, #tpu.memory_space<vmem>>, %arg4: memref<128x128xbf16, #tpu.memory_space<vmem>>, %arg5: memref<1x128xf32, #tpu.memory_space<vmem>>, %arg6: memref<1x128xf32, #tpu.memory_space<vmem>>, %arg7: memref<1x128xf32, #tpu.memory_space<vmem>>, %arg8: memref<8x128xf32, #tpu.memory_space<vmem>>) attributes {dimension_semantics = [#tpu.dimension_semantics<parallel>], iteration_bounds = array<i64: 1>, scalar_prefetch = 0 : i64, scratch_operands = 0 : i64, tpu.core_type = #tpu.core_type<tc>, window_params = [{transform_indices = @transform_0, window_bounds = array<i64: 8, 128>}, {pipeline_mode = #tpu.pipeline_mode<synchronous>, transform_indices = @transform_1, window_bounds = array<i64: 128, 128>}, {pipeline_mode = #tpu.pipeline_mode<synchronous>, transform_indices = @transform_2, window_bounds = array<i64: 128, 128>}, {pipeline_mode = #tpu.pipeline_mode<synchronous>, transform_indices = @transform_3, window_bounds = array<i64: 128, 128>}, {pipeline_mode = #tpu.pipeline_mode<synchronous>, transform_indices = @transform_4, window_bounds = array<i64: 1, 128>}, {pipeline_mode = #tpu.pipeline_mode<synchronous>, transform_indices = @transform_5, window_bounds = array<i64: 1, 128>}, {pipeline_mode = #tpu.pipeline_mode<synchronous>, transform_indices = @transform_6, window_bounds = array<i64: 1, 128>}, {transform_indices = @transform_7, window_bounds = array<i64: 8, 128>}]} {
    %c0 = arith.constant 0 : index
    %c0_0 = arith.constant 0 : index
    %0 = vector.load %arg1[%c0, %c0_0] : memref<8x128xbf16, #tpu.memory_space<vmem>>, vector<8x128xbf16>
    %c0_1 = arith.constant 0 : index
    %c0_2 = arith.constant 0 : index
    %1 = vector.load %arg2[%c0_1, %c0_2] : memref<128x128xbf16, #tpu.memory_space<vmem>>, vector<128x128xbf16>
    %cst = arith.constant dense<0.000000e+00> : vector<8x128xf32>
    %2 = tpu.matmul %0, %1, %cst {dimension_numbers = #tpu.dot_dimension_numbers<[1], [0], [0], [1], [0, 0, 1, 1], [], []>} : vector<8x128xbf16>, vector<128x128xbf16>, vector<8x128xf32> -> vector<8x128xf32>
    %c0_3 = arith.constant 0 : index
    %c0_4 = arith.constant 0 : index
    %3 = vector.load %arg5[%c0_3, %c0_4] : memref<1x128xf32, #tpu.memory_space<vmem>>, vector<1x128xf32>
    %4 = vector.broadcast %3 : vector<1x128xf32> to vector<8x128xf32>
    %5 = arith.addf %2, %4 : vector<8x128xf32>
    %cst_5 = arith.constant 2.000000e+01 : f32
    %6 = vector.broadcast %cst_5 : f32 to vector<8x128xf32>
    %7 = arith.minimumf %5, %6 : vector<8x128xf32>
    %8 = math.exp %7 : vector<8x128xf32>
    %cst_6 = arith.constant 2.000000e+00 : f32
    %9 = vector.broadcast %cst_6 : f32 to vector<8x128xf32>
    %10 = arith.addf %8, %9 : vector<8x128xf32>
    %11 = arith.mulf %8, %10 : vector<8x128xf32>
    %12 = arith.mulf %5, %11 : vector<8x128xf32>
    %cst_7 = arith.constant 2.000000e+00 : f32
    %13 = vector.broadcast %cst_7 : f32 to vector<8x128xf32>
    %14 = arith.addf %11, %13 : vector<8x128xf32>
    %15 = tpu.reciprocal %14 {approx = true} : vector<8x128xf32> -> vector<8x128xf32>
    %16 = arith.mulf %12, %15 : vector<8x128xf32>
    %cst_8 = arith.constant 2.000000e+01 : f32
    %17 = vector.broadcast %cst_8 : f32 to vector<8x128xf32>
    %18 = arith.cmpf ogt, %5, %17 : vector<8x128xf32>
    %19 = arith.select %18, %5, %16 : vector<8x128xi1>, vector<8x128xf32>
    %20 = arith.truncf %19 : vector<8x128xf32> to vector<8x128xbf16>
    %c0_9 = arith.constant 0 : index
    %c0_10 = arith.constant 0 : index
    %21 = vector.load %arg3[%c0_9, %c0_10] : memref<128x128xbf16, #tpu.memory_space<vmem>>, vector<128x128xbf16>
    %cst_11 = arith.constant dense<0.000000e+00> : vector<8x128xf32>
    %22 = tpu.matmul %20, %21, %cst_11 {dimension_numbers = #tpu.dot_dimension_numbers<[1], [0], [0], [1], [0, 0, 1, 1], [], []>} : vector<8x128xbf16>, vector<128x128xbf16>, vector<8x128xf32> -> vector<8x128xf32>
    %c0_12 = arith.constant 0 : index
    %c0_13 = arith.constant 0 : index
    %23 = vector.load %arg6[%c0_12, %c0_13] : memref<1x128xf32, #tpu.memory_space<vmem>>, vector<1x128xf32>
    %24 = vector.broadcast %23 : vector<1x128xf32> to vector<8x128xf32>
    %25 = arith.addf %22, %24 : vector<8x128xf32>
    %cst_14 = arith.constant 2.000000e+01 : f32
    %26 = vector.broadcast %cst_14 : f32 to vector<8x128xf32>
    %27 = arith.minimumf %25, %26 : vector<8x128xf32>
    %28 = math.exp %27 : vector<8x128xf32>
    %cst_15 = arith.constant 2.000000e+00 : f32
    %29 = vector.broadcast %cst_15 : f32 to vector<8x128xf32>
    %30 = arith.addf %28, %29 : vector<8x128xf32>
    %31 = arith.mulf %28, %30 : vector<8x128xf32>
    %32 = arith.mulf %25, %31 : vector<8x128xf32>
    %cst_16 = arith.constant 2.000000e+00 : f32
    %33 = vector.broadcast %cst_16 : f32 to vector<8x128xf32>
    %34 = arith.addf %31, %33 : vector<8x128xf32>
    %35 = tpu.reciprocal %34 {approx = true} : vector<8x128xf32> -> vector<8x128xf32>
    %36 = arith.mulf %32, %35 : vector<8x128xf32>
    %cst_17 = arith.constant 2.000000e+01 : f32
    %37 = vector.broadcast %cst_17 : f32 to vector<8x128xf32>
    %38 = arith.cmpf ogt, %25, %37 : vector<8x128xf32>
    %39 = arith.select %38, %25, %36 : vector<8x128xi1>, vector<8x128xf32>
    %40 = arith.truncf %39 : vector<8x128xf32> to vector<8x128xbf16>
    %c0_18 = arith.constant 0 : index
    %c0_19 = arith.constant 0 : index
    %41 = vector.load %arg4[%c0_18, %c0_19] : memref<128x128xbf16, #tpu.memory_space<vmem>>, vector<128x128xbf16>
    %cst_20 = arith.constant dense<0.000000e+00> : vector<8x128xf32>
    %42 = tpu.matmul %40, %41, %cst_20 {dimension_numbers = #tpu.dot_dimension_numbers<[1], [0], [0], [1], [0, 0, 1, 1], [], []>} : vector<8x128xbf16>, vector<128x128xbf16>, vector<8x128xf32> -> vector<8x128xf32>
    %c0_21 = arith.constant 0 : index
    %c0_22 = arith.constant 0 : index
    %43 = vector.load %arg7[%c0_21, %c0_22] : memref<1x128xf32, #tpu.memory_space<vmem>>, vector<1x128xf32>
    %44 = vector.broadcast %43 : vector<1x128xf32> to vector<8x128xf32>
    %45 = arith.addf %42, %44 : vector<8x128xf32>
    %c0_23 = arith.constant 0 : index
    %c0_24 = arith.constant 0 : index
    %46 = vector.load %arg8[%c0_23, %c0_24] : memref<8x128xf32, #tpu.memory_space<vmem>>, vector<8x128xf32>
    tpu.vector_store %arg8[%c0_23, %c0_24], %45 {strides = array<i32>} : memref<8x128xf32, #tpu.memory_space<vmem>>, vector<8x128xf32>,
    return
  }
  func.func @transform_0(%arg0: i32) -> (i32, i32) {
    %c0_i32 = arith.constant 0 : i32
    %c0_i32_0 = arith.constant 0 : i32
    return %arg0, %c0_i32 : i32, i32
  }
  func.func @transform_1(%arg0: i32) -> (i32, i32) {
    %c0_i32 = arith.constant 0 : i32
    %c0_i32_0 = arith.constant 0 : i32
    %c0_i32_1 = arith.constant 0 : i32
    return %c0_i32, %c0_i32_0 : i32, i32
  }
  func.func @transform_2(%arg0: i32) -> (i32, i32) {
    %c0_i32 = arith.constant 0 : i32
    %c0_i32_0 = arith.constant 0 : i32
    %c0_i32_1 = arith.constant 0 : i32
    return %c0_i32, %c0_i32_0 : i32, i32
  }
  func.func @transform_3(%arg0: i32) -> (i32, i32) {
    %c0_i32 = arith.constant 0 : i32
    %c0_i32_0 = arith.constant 0 : i32
    %c0_i32_1 = arith.constant 0 : i32
    return %c0_i32, %c0_i32_0 : i32, i32
  }
  func.func @transform_4(%arg0: i32) -> (i32, i32) {
    %c0_i32 = arith.constant 0 : i32
    %c0_i32_0 = arith.constant 0 : i32
    %c0_i32_1 = arith.constant 0 : i32
    return %c0_i32, %c0_i32_0 : i32, i32
  }
  func.func @transform_5(%arg0: i32) -> (i32, i32) {
    %c0_i32 = arith.constant 0 : i32
    %c0_i32_0 = arith.constant 0 : i32
    %c0_i32_1 = arith.constant 0 : i32
    return %c0_i32, %c0_i32_0 : i32, i32
  }
  func.func @transform_6(%arg0: i32) -> (i32, i32) {
    %c0_i32 = arith.constant 0 : i32
    %c0_i32_0 = arith.constant 0 : i32
    %c0_i32_1 = arith.constant 0 : i32
    return %c0_i32, %c0_i32_0 : i32, i32
  }
  func.func @transform_7(%arg0: i32) -> (i32, i32) {
    %c0_i32 = arith.constant 0 : i32
    %c0_i32_0 = arith.constant 0 : i32
    return %arg0, %c0_i32 : i32, i32
  }
}

</mosaic_0001>

<llo_original>
// kernel: tpu_custom_call.1
$region0: #{tpu_custom_call.1}
  #allocation0 [shape = 'u32[]', space=smem, size = 0x4, offset = 0x4, fixed_abs, tag = 'smem constant byte address 0x4 - core index']
  #allocation1 [shape = 'u32[144,128]{1,0:T(1,128)}', space=vmem, size = 0x12000, scoped, tag = 'internal scratch']
  %s0 = inlined_call_operand.hbm [shape: bf16[8,128], index: 0, kind: input, shape index: {}]
  %s1 = inlined_call_operand.hbm [shape: bf16[128,128], index: 1, kind: input, shape index: {}]
  %s2 = inlined_call_operand.hbm [shape: bf16[128,128], index: 2, kind: input, shape index: {}]
  %s3 = inlined_call_operand.hbm [shape: bf16[128,128], index: 3, kind: input, shape index: {}]
  %s4 = inlined_call_operand.vmem [shape: f32[1,128], index: 4, kind: input, shape index: {}]
  %s5 = inlined_call_operand.vmem [shape: f32[1,128], index: 5, kind: input, shape index: {}]
  %s6 = inlined_call_operand.vmem [shape: f32[1,128], index: 6, kind: input, shape index: {}]
  %s7 = inlined_call_operand.hbm [shape: f32[8,128], index: 7, kind: output, shape index: {}]
  %s8 = sld [smem:[#allocation0]]
  $region54: #{tpu_custom_call.1} parent=0
    _
  %s10 = ssub.s32 1, %s8
  %s11 = scalar_select 0, %s10, %s8
  $region1: #{tpu_custom_call.1} parent=0
    #allocation2 [shape = 'u8[2048]{0}', space=vmem, size = 0x800, scoped, tag = 'input window, operand 0, single buffered']
    #allocation3 [shape = 's32[1]{0}', space=sflag, size = 0x4, scoped, tag = 'scoped memory for tpu_custom_call.1']
    #allocation4 [shape = 's32[1]{0}', space=sflag, size = 0x4, scoped, tag = 'scoped memory for tpu_custom_call.1']
    #allocation5 [shape = 'u8[32768]{0}', space=vmem, size = 0x8000, scoped, tag = 'input window, operand 1, single buffered']
    #allocation6 [shape = 's32[1]{0}', space=sflag, size = 0x4, scoped, tag = 'scoped memory for tpu_custom_call.1']
    #allocation7 [shape = 'u8[32768]{0}', space=vmem, size = 0x8000, scoped, tag = 'input window, operand 2, single buffered']
    #allocation8 [shape = 'u8[32768]{0}', space=vmem, size = 0x8000, scoped, tag = 'input window, operand 3, single buffered']
    #allocation9 [shape = 's32[1]{0}', space=sflag, size = 0x4, scoped, tag = 'scoped memory for tpu_custom_call.1']
    #allocation10 [shape = 'u8[4096]{0}', space=vmem, size = 0x1000, scoped, tag = 'output window, operand 0, single buffered']
    %12 = vsyncpa [#allocation3], 0
    %13 = vsyncpa [#allocation6], 0
    %14 = vsyncpa [#allocation9], 0
    %15 = vsyncpa [#allocation4], 0
    // Predicated region
    $region2: #{tpu_custom_call.1} parent=1 // pred_check
      _
    $region3: #{tpu_custom_call.1} parent=1 // pred_check_branch
      %17 = sbr.rel (0) target = $region5
    $region4: #{tpu_custom_call.1} parent=1 // pred_region
      %s19 = ssub.s32 64, 64
      %20 = vsyncadd [#allocation3], %s19
      %s22 = sshll.u32 [#allocation2], 4
      %s23 = int_to_ptr.vmem [resolvable:$true] %s22
      %25 = dma.hbm_to_vmem [thread:$0]  %s0, 64, %s23, [#allocation3]
    $region5: #{tpu_custom_call.1} parent=1 // pred_fallthru
      _
    // Predicated region
    $region6: #{tpu_custom_call.1} parent=1 // pred_check
      _
    $region7: #{tpu_custom_call.1} parent=1 // pred_check_branch
      %27 = sbr.rel (0) target = $region9
    $region8: #{tpu_custom_call.1} parent=1 // pred_region
      %s29 = ssub.s32 1024, 1024
      %30 = vsyncadd [#allocation6], %s29
      %s31 = sshll.u32 [#allocation5], 4
      %s32 = int_to_ptr.vmem [resolvable:$true] %s31
      %37 = dma.hbm_to_vmem [thread:$0]  %s1, 1024, %s32, [#allocation6], 64, 64, 4
    $region9: #{tpu_custom_call.1} parent=1 // pred_fallthru
      _
    // Predicated region
    $region10: #{tpu_custom_call.1} parent=1 // pred_check
      _
    $region11: #{tpu_custom_call.1} parent=1 // pred_check_branch
      %39 = sbr.rel (0) target = $region13
    $region12: #{tpu_custom_call.1} parent=1 // pred_region
      %s41 = ssub.s32 1024, 1024
      %42 = vsyncadd [#allocation6], %s41
      %s43 = sshll.u32 [#allocation7], 4
      %s44 = int_to_ptr.vmem [resolvable:$true] %s43
      %49 = dma.hbm_to_vmem [thread:$0]  %s2, 1024, %s44, [#allocation6], 64, 64, 4
    $region13: #{tpu_custom_call.1} parent=1 // pred_fallthru
      _
    // Predicated region
    $region14: #{tpu_custom_call.1} parent=1 // pred_check
      _
    $region15: #{tpu_custom_call.1} parent=1 // pred_check_branch
      %51 = sbr.rel (0) target = $region17
    $region16: #{tpu_custom_call.1} parent=1 // pred_region
      %s53 = ssub.s32 1024, 1024
      %54 = vsyncadd [#allocation9], %s53
      %s55 = sshll.u32 [#allocation8], 4
      %s56 = int_to_ptr.vmem [resolvable:$true] %s55
      %61 = dma.hbm_to_vmem [thread:$0]  %s3, 1024, %s56, [#allocation9], 64, 64, 4
    $region17: #{tpu_custom_call.1} parent=1 // pred_fallthru
      _
    // Predicated region
    $region18: #{tpu_custom_call.1} parent=1 // pred_check
      _
    $region19: #{tpu_custom_call.1} parent=1 // pred_check_branch
      %63 = sbr.rel (0) target = $region21
    $region20: #{tpu_custom_call.1} parent=1 // pred_region
      _
    $region21: #{tpu_custom_call.1} parent=1 // pred_fallthru
      _
    // Predicated region
    $region22: #{tpu_custom_call.1} parent=1 // pred_check
      _
    $region23: #{tpu_custom_call.1} parent=1 // pred_check_branch
      %65 = sbr.rel (0) target = $region25
    $region24: #{tpu_custom_call.1} parent=1 // pred_region
      _
    $region25: #{tpu_custom_call.1} parent=1 // pred_fallthru
      _
    // Predicated region
    $region26: #{tpu_custom_call.1} parent=1 // pred_check
      _
    $region27: #{tpu_custom_call.1} parent=1 // pred_check_branch
      %67 = sbr.rel (0) target = $region29
    $region28: #{tpu_custom_call.1} parent=1 // pred_region
      _
    $region29: #{tpu_custom_call.1} parent=1 // pred_fallthru
      _
    // Predicated region
    $region30: #{tpu_custom_call.1} parent=1 // pred_check
      _
    $region31: #{tpu_custom_call.1} parent=1 // pred_check_branch
      %69 = sbr.rel (0) target = $region33
    $region32: #{tpu_custom_call.1} parent=1 // pred_region
      %70 = dma.done [#allocation3], 64
    $region33: #{tpu_custom_call.1} parent=1 // pred_fallthru
      _
    // Predicated region
    $region34: #{tpu_custom_call.1} parent=1 // pred_check
      _
    $region35: #{tpu_custom_call.1} parent=1 // pred_check_branch
      %72 = sbr.rel (0) target = $region37
    $region36: #{tpu_custom_call.1} parent=1 // pred_region
      %73 = dma.done [#allocation6], 1024
    $region37: #{tpu_custom_call.1} parent=1 // pred_fallthru
      _
    // Predicated region
    $region38: #{tpu_custom_call.1} parent=1 // pred_check
      _
    $region39: #{tpu_custom_call.1} parent=1 // pred_check_branch
      %75 = sbr.rel (0) target = $region41
    $region40: #{tpu_custom_call.1} parent=1 // pred_region
      %76 = dma.done [#allocation6], 1024
    $region41: #{tpu_custom_call.1} parent=1 // pred_fallthru
      _
    // Predicated region
    $region42: #{tpu_custom_call.1} parent=1 // pred_check
      _
    $region43: #{tpu_custom_call.1} parent=1 // pred_check_branch
      %78 = sbr.rel (0) target = $region45
    $region44: #{tpu_custom_call.1} parent=1 // pred_region
      %79 = dma.done [#allocation9], 1024
    $region45: #{tpu_custom_call.1} parent=1 // pred_fallthru
      _
    %v81 = vld [vmem:[#allocation2] sm:$0xf]
    %v82 = vld [vmem:[#allocation5] sm:$0xf]
    %v83 = vld [vmem:[#allocation5 + $0x4] sm:$0xf]
    %v84 = vld [vmem:[#allocation5 + $0x8] sm:$0xf]
    %v85 = vld [vmem:[#allocation5 + $0xc] sm:$0xf]
    %v86 = vld [vmem:[#allocation5 + $0x10] sm:$0xf]
    %v87 = vld [vmem:[#allocation5 + $0x14] sm:$0xf]
    %v88 = vld [vmem:[#allocation5 + $0x18] sm:$0xf]
    %v89 = vld [vmem:[#allocation5 + $0x1c] sm:$0xf]
    %v90 = vld [vmem:[#allocation5 + $0x20] sm:$0xf]
    %v91 = vld [vmem:[#allocation5 + $0x24] sm:$0xf]
    %v92 = vld [vmem:[#allocation5 + $0x28] sm:$0xf]
    %v93 = vld [vmem:[#allocation5 + $0x2c] sm:$0xf]
    %v94 = vld [vmem:[#allocation5 + $0x30] sm:$0xf]
    %v95 = vld [vmem:[#allocation5 + $0x34] sm:$0xf]
    %v96 = vld [vmem:[#allocation5 + $0x38] sm:$0xf]
    %v97 = vld [vmem:[#allocation5 + $0x3c] sm:$0xf]
    %v98 = vld [vmem:[%s4] sm:$0x1]
    %v100 = vlaneseq
    %v101 = vshrl.u32 %v100, 7
    %v102 = vsub.s32 0, %v101
    %v103 = vrot.slane %v98, %v102
    %v121 = vunpack.c.l.b16 %v82
    %v122 = vunpack.c.l.b16 %v83
    %v123 = vunpack.c.l.b16 %v84
    %v124 = vunpack.c.l.b16 %v85
    %v125 = vunpack.c.l.b16 %v86
    %v126 = vunpack.c.l.b16 %v87
    %v127 = vunpack.c.l.b16 %v88
    %v128 = vunpack.c.l.b16 %v89
    %v129 = vunpack.c.l.b16 %v90
    %v130 = vunpack.c.l.b16 %v91
    %v131 = vunpack.c.l.b16 %v92
    %v132 = vunpack.c.l.b16 %v93
    %v133 = vunpack.c.l.b16 %v94
    %v134 = vunpack.c.l.b16 %v95
    %v135 = vunpack.c.l.b16 %v96
    %v136 = vunpack.c.l.b16 %v97
    %v137 = vpack.c.b16 %v122, %v121
    %v138 = vpack.c.b16 %v124, %v123
    %v139 = vpack.c.b16 %v126, %v125
    %v140 = vpack.c.b16 %v128, %v127
    %v141 = vpack.c.b16 %v130, %v129
    %v142 = vpack.c.b16 %v132, %v131
    %v143 = vpack.c.b16 %v134, %v133
    %v144 = vpack.c.b16 %v136, %v135
    %153 = vmatprep.subr.bf16.mxu0 0
    %154 = vmatpush1.bf16.msra.mxu0 %v137
    %155 = vmatprep.subr.bf16.mxu0 0
    %156 = vmatpush1.bf16.msra.mxu0 %v138
    %157 = vmatprep.subr.bf16.mxu0 0
    %158 = vmatpush1.bf16.msra.mxu0 %v139
    %159 = vmatprep.subr.bf16.mxu0 0
    %160 = vmatpush1.bf16.msra.mxu0 %v140
    %161 = vmatprep.subr.bf16.mxu0 0
    %162 = vmatpush1.bf16.msra.mxu0 %v141
    %163 = vmatprep.subr.bf16.mxu0 0
    %164 = vmatpush1.bf16.msra.mxu0 %v142
    %165 = vmatprep.subr.bf16.mxu0 0
    %166 = vmatpush1.bf16.msra.mxu0 %v143
    %167 = vmatprep.subr.bf16.mxu0 0
    %168 = vmatpush1.bf16.msra.mxu0 %v144
    %169 = vmatprep.subr.bf16.mxu0 0
    %170 = vmatpush1.bf16.msra.mxu0 0
    %171 = vmatprep.subr.bf16.mxu0 0
    %172 = vmatpush1.bf16.msra.mxu0 0
    %173 = vmatprep.subr.bf16.mxu0 0
    %174 = vmatpush1.bf16.msra.mxu0 0
    %175 = vmatprep.subr.bf16.mxu0 0
    %176 = vmatpush1.bf16.msra.mxu0 0
    %177 = vmatprep.subr.bf16.mxu0 0
    %178 = vmatpush1.bf16.msra.mxu0 0
    %179 = vmatprep.subr.bf16.mxu0 0
    %180 = vmatpush1.bf16.msra.mxu0 0
    %181 = vmatprep.subr.bf16.mxu0 0
    %182 = vmatpush1.bf16.msra.mxu0 0
    %183 = vmatprep.subr.bf16.mxu0 0
    %184 = vmatpush1.bf16.msra.mxu0 0
    %185 = vmatprep.mubr.bf16.mxu0 0
    %186 = vmatmul.mubr.bf16.gmra.mrb[0].mxu0 %v81
    %v187 = vpop.f32.mrb[0].mxu0
    %v188 = vadd.f32 %v103, %v187
    %v189 = vpop.f32.mrb[0].mxu0
    %v190 = vpop.f32.mrb[0].mxu0
    %v191 = vpop.f32.mrb[0].mxu0
    %192 = vdwg.mxu0
    %v193 = vmin.f32 %v188, 20.0
    %v194 = vmul.f32 %v193, 1.442695
    %v195 = vpow.pop %v194
    %v196 = vadd.f32 %v195, 2.0
    %v197 = vmul.f32 %v195, %v196
    %v198 = vmul.f32 %v188, %v197
    %v199 = vadd.f32 %v197, 2.0
    %v200 = vrcp.pop %v199
    %v201 = vmul.f32 %v198, %v200
    %vm202 = vcmp.gt.f32.partialorder %v188, 20.0
    %v203 = vsel %vm202, %v188, %v201
    %v204 = vpack.c.bf16 %v203, %v203
    %v205 = vld [vmem:[#allocation7] sm:$0xf]
    %v206 = vld [vmem:[#allocation7 + $0x4] sm:$0xf]
    %v207 = vld [vmem:[#allocation7 + $0x8] sm:$0xf]
    %v208 = vld [vmem:[#allocation7 + $0xc] sm:$0xf]
    %v209 = vld [vmem:[#allocation7 + $0x10] sm:$0xf]
    %v210 = vld [vmem:[#allocation7 + $0x14] sm:$0xf]
    %v211 = vld [vmem:[#allocation7 + $0x18] sm:$0xf]
    %v212 = vld [vmem:[#allocation7 + $0x1c] sm:$0xf]
    %v213 = vld [vmem:[#allocation7 + $0x20] sm:$0xf]
    %v214 = vld [vmem:[#allocation7 + $0x24] sm:$0xf]
    %v215 = vld [vmem:[#allocation7 + $0x28] sm:$0xf]
    %v216 = vld [vmem:[#allocation7 + $0x2c] sm:$0xf]
    %v217 = vld [vmem:[#allocation7 + $0x30] sm:$0xf]
    %v218 = vld [vmem:[#allocation7 + $0x34] sm:$0xf]
    %v219 = vld [vmem:[#allocation7 + $0x38] sm:$0xf]
    %v220 = vld [vmem:[#allocation7 + $0x3c] sm:$0xf]
    %v221 = vld [vmem:[%s5] sm:$0x1]
    %v223 = vlaneseq
    %v224 = vshrl.u32 %v223, 7
    %v225 = vsub.s32 0, %v224
    %v226 = vrot.slane %v221, %v225
    %v244 = vunpack.c.l.b16 %v205
    %v245 = vunpack.c.l.b16 %v206
    %v246 = vunpack.c.l.b16 %v207
    %v247 = vunpack.c.l.b16 %v208
    %v248 = vunpack.c.l.b16 %v209
    %v249 = vunpack.c.l.b16 %v210
    %v250 = vunpack.c.l.b16 %v211
    %v251 = vunpack.c.l.b16 %v212
    %v252 = vunpack.c.l.b16 %v213
    %v253 = vunpack.c.l.b16 %v214
    %v254 = vunpack.c.l.b16 %v215
    %v255 = vunpack.c.l.b16 %v216
    %v256 = vunpack.c.l.b16 %v217
    %v257 = vunpack.c.l.b16 %v218
    %v258 = vunpack.c.l.b16 %v219
    %v259 = vunpack.c.l.b16 %v220
    %v260 = vpack.c.b16 %v245, %v244
    %v261 = vpack.c.b16 %v247, %v246
    %v262 = vpack.c.b16 %v249, %v248
    %v263 = vpack.c.b16 %v251, %v250
    %v264 = vpack.c.b16 %v253, %v252
    %v265 = vpack.c.b16 %v255, %v254
    %v266 = vpack.c.b16 %v257, %v256
    %v267 = vpack.c.b16 %v259, %v258
    %276 = vmatprep.subr.bf16.mxu0 0
    %277 = vmatpush1.bf16.msra.mxu0 %v260
    %278 = vmatprep.subr.bf16.mxu0 0
    %279 = vmatpush1.bf16.msra.mxu0 %v261
    %280 = vmatprep.subr.bf16.mxu0 0
    %281 = vmatpush1.bf16.msra.mxu0 %v262
    %282 = vmatprep.subr.bf16.mxu0 0
    %283 = vmatpush1.bf16.msra.mxu0 %v263
    %284 = vmatprep.subr.bf16.mxu0 0
    %285 = vmatpush1.bf16.msra.mxu0 %v264
    %286 = vmatprep.subr.bf16.mxu0 0
    %287 = vmatpush1.bf16.msra.mxu0 %v265
    %288 = vmatprep.subr.bf16.mxu0 0
    %289 = vmatpush1.bf16.msra.mxu0 %v266
    %290 = vmatprep.subr.bf16.mxu0 0
    %291 = vmatpush1.bf16.msra.mxu0 %v267
    %292 = vmatprep.subr.bf16.mxu0 0
    %293 = vmatpush1.bf16.msra.mxu0 0
    %294 = vmatprep.subr.bf16.mxu0 0
    %295 = vmatpush1.bf16.msra.mxu0 0
    %296 = vmatprep.subr.bf16.mxu0 0
    %297 = vmatpush1.bf16.msra.mxu0 0
    %298 = vmatprep.subr.bf16.mxu0 0
    %299 = vmatpush1.bf16.msra.mxu0 0
    %300 = vmatprep.subr.bf16.mxu0 0
    %301 = vmatpush1.bf16.msra.mxu0 0
    %302 = vmatprep.subr.bf16.mxu0 0
    %303 = vmatpush1.bf16.msra.mxu0 0
    %304 = vmatprep.subr.bf16.mxu0 0
    %305 = vmatpush1.bf16.msra.mxu0 0
    %306 = vmatprep.subr.bf16.mxu0 0
    %307 = vmatpush1.bf16.msra.mxu0 0
    %308 = vmatprep.mubr.bf16.mxu0 0
    %309 = vmatmul.mubr.bf16.gmra.mrb[0].mxu0 %v204
    %v310 = vpop.f32.mrb[0].mxu0
    %v311 = vadd.f32 %v226, %v310
    %v312 = vpop.f32.mrb[0].mxu0
    %v313 = vpop.f32.mrb[0].mxu0
    %v314 = vpop.f32.mrb[0].mxu0
    %315 = vdwg.mxu0
    %v316 = vmin.f32 %v311, 20.0
    %v317 = vmul.f32 %v316, 1.442695
    %v318 = vpow.pop %v317
    %v319 = vadd.f32 %v318, 2.0
    %v320 = vmul.f32 %v318, %v319
    %v321 = vmul.f32 %v311, %v320
    %v322 = vadd.f32 %v320, 2.0
    %v323 = vrcp.pop %v322
    %v324 = vmul.f32 %v321, %v323
    %vm325 = vcmp.gt.f32.partialorder %v311, 20.0
    %v326 = vsel %vm325, %v311, %v324
    %v327 = vpack.c.bf16 %v326, %v326
    %v328 = vld [vmem:[#allocation8] sm:$0xf]
    %v329 = vld [vmem:[#allocation8 + $0x4] sm:$0xf]
    %v330 = vld [vmem:[#allocation8 + $0x8] sm:$0xf]
    %v331 = vld [vmem:[#allocation8 + $0xc] sm:$0xf]
    %v332 = vld [vmem:[#allocation8 + $0x10] sm:$0xf]
    %v333 = vld [vmem:[#allocation8 + $0x14] sm:$0xf]
    %v334 = vld [vmem:[#allocation8 + $0x18] sm:$0xf]
    %v335 = vld [vmem:[#allocation8 + $0x1c] sm:$0xf]
    %v336 = vld [vmem:[#allocation8 + $0x20] sm:$0xf]
    %v337 = vld [vmem:[#allocation8 + $0x24] sm:$0xf]
    %v338 = vld [vmem:[#allocation8 + $0x28] sm:$0xf]
    %v339 = vld [vmem:[#allocation8 + $0x2c] sm:$0xf]
    %v340 = vld [vmem:[#allocation8 + $0x30] sm:$0xf]
    %v341 = vld [vmem:[#allocation8 + $0x34] sm:$0xf]
    %v342 = vld [vmem:[#allocation8 + $0x38] sm:$0xf]
    %v343 = vld [vmem:[#allocation8 + $0x3c] sm:$0xf]
    %v344 = vld [vmem:[%s6] sm:$0x1]
    %v346 = vlaneseq
    %v347 = vshrl.u32 %v346, 7
    %v348 = vsub.s32 0, %v347
    %v349 = vrot.slane %v344, %v348
    %v367 = vunpack.c.l.b16 %v328
    %v368 = vunpack.c.l.b16 %v329
    %v369 = vunpack.c.l.b16 %v330
    %v370 = vunpack.c.l.b16 %v331
    %v371 = vunpack.c.l.b16 %v332
    %v372 = vunpack.c.l.b16 %v333
    %v373 = vunpack.c.l.b16 %v334
    %v374 = vunpack.c.l.b16 %v335
    %v375 = vunpack.c.l.b16 %v336
    %v376 = vunpack.c.l.b16 %v337
    %v377 = vunpack.c.l.b16 %v338
    %v378 = vunpack.c.l.b16 %v339
    %v379 = vunpack.c.l.b16 %v340
    %v380 = vunpack.c.l.b16 %v341
    %v381 = vunpack.c.l.b16 %v342
    %v382 = vunpack.c.l.b16 %v343
    %v383 = vpack.c.b16 %v368, %v367
    %v384 = vpack.c.b16 %v370, %v369
    %v385 = vpack.c.b16 %v372, %v371
    %v386 = vpack.c.b16 %v374, %v373
    %v387 = vpack.c.b16 %v376, %v375
    %v388 = vpack.c.b16 %v378, %v377
    %v389 = vpack.c.b16 %v380, %v379
    %v390 = vpack.c.b16 %v382, %v381
    %399 = vmatprep.subr.bf16.mxu0 0
    %400 = vmatpush1.bf16.msra.mxu0 %v383
    %401 = vmatprep.subr.bf16.mxu0 0
    %402 = vmatpush1.bf16.msra.mxu0 %v384
    %403 = vmatprep.subr.bf16.mxu0 0
    %404 = vmatpush1.bf16.msra.mxu0 %v385
    %405 = vmatprep.subr.bf16.mxu0 0
    %406 = vmatpush1.bf16.msra.mxu0 %v386
    %407 = vmatprep.subr.bf16.mxu0 0
    %408 = vmatpush1.bf16.msra.mxu0 %v387
    %409 = vmatprep.subr.bf16.mxu0 0
    %410 = vmatpush1.bf16.msra.mxu0 %v388
    %411 = vmatprep.subr.bf16.mxu0 0
    %412 = vmatpush1.bf16.msra.mxu0 %v389
    %413 = vmatprep.subr.bf16.mxu0 0
    %414 = vmatpush1.bf16.msra.mxu0 %v390
    %415 = vmatprep.subr.bf16.mxu0 0
    %416 = vmatpush1.bf16.msra.mxu0 0
    %417 = vmatprep.subr.bf16.mxu0 0
    %418 = vmatpush1.bf16.msra.mxu0 0
    %419 = vmatprep.subr.bf16.mxu0 0
    %420 = vmatpush1.bf16.msra.mxu0 0
    %421 = vmatprep.subr.bf16.mxu0 0
    %422 = vmatpush1.bf16.msra.mxu0 0
    %423 = vmatprep.subr.bf16.mxu0 0
    %424 = vmatpush1.bf16.msra.mxu0 0
    %425 = vmatprep.subr.bf16.mxu0 0
    %426 = vmatpush1.bf16.msra.mxu0 0
    %427 = vmatprep.subr.bf16.mxu0 0
    %428 = vmatpush1.bf16.msra.mxu0 0
    %429 = vmatprep.subr.bf16.mxu0 0
    %430 = vmatpush1.bf16.msra.mxu0 0
    %431 = vmatprep.mubr.bf16.mxu0 0
    %432 = vmatmul.mubr.bf16.gmra.mrb[0].mxu0 %v327
    %v433 = vpop.f32.mrb[0].mxu0
    %v434 = vadd.f32 %v349, %v433
    %v435 = vpop.f32.mrb[0].mxu0
    %v436 = vpop.f32.mrb[0].mxu0
    %v437 = vpop.f32.mrb[0].mxu0
    %438 = vdwg.mxu0
    %439 = vst [vmem:[#allocation10] sm:$0xff] %v434
    // Predicated region
    $region46: #{tpu_custom_call.1} parent=1 // pred_check
      _
    $region47: #{tpu_custom_call.1} parent=1 // pred_check_branch
      %441 = sbr.rel (0) target = $region49
    $region48: #{tpu_custom_call.1} parent=1 // pred_region
      %s443 = ssub.s32 128, 128
      %444 = vsyncadd [#allocation4], %s443
      %s446 = sshll.u32 [#allocation10], 4
      %s447 = int_to_ptr.vmem [resolvable:$true] %s446
      %449 = dma.vmem_to_hbm [thread:$0]  %s447, 128, %s7, [#allocation4]
    $region49: #{tpu_custom_call.1} parent=1 // pred_fallthru
      _
    // Predicated region
    $region50: #{tpu_custom_call.1} parent=1 // pred_check
      _
    $region51: #{tpu_custom_call.1} parent=1 // pred_check_branch
      %451 = sbr.rel (0) target = $region53
    $region52: #{tpu_custom_call.1} parent=1 // pred_region
      %452 = dma.done [#allocation4], 128
    $region53: #{tpu_custom_call.1} parent=1 // pred_fallthru
      _
    %453 = vsyncpa [#allocation3], 1
    %454 = vsyncpa [#allocation6], 1
    %455 = vsyncpa [#allocation9], 1
    %456 = vsyncpa [#allocation4], 1

// kernel: tpu_custom_call.1
$region0: #{tpu_custom_call.1}
  #allocation0 [shape = 'u32[]', space=smem, size = 0x4, offset = 0x4, fixed_abs, tag = 'smem constant byte address 0x4 - core index']
  #allocation1 [shape = 'u32[144,128]{1,0:T(1,128)}', space=vmem, size = 0x12000, scoped, tag = 'internal scratch']
  %s0 = inlined_call_operand.hbm [shape: bf16[8,128], index: 0, kind: input, shape index: {}]
  %s1 = inlined_call_operand.hbm [shape: bf16[128,128], index: 1, kind: input, shape index: {}]
  %s2 = inlined_call_operand.hbm [shape: bf16[128,128], index: 2, kind: input, shape index: {}]
  %s3 = inlined_call_operand.hbm [shape: bf16[128,128], index: 3, kind: input, shape index: {}]
  %s4 = inlined_call_operand.vmem [shape: f32[1,128], index: 4, kind: input, shape index: {}]
  %s5 = inlined_call_operand.vmem [shape: f32[1,128], index: 5, kind: input, shape index: {}]
  %s6 = inlined_call_operand.vmem [shape: f32[1,128], index: 6, kind: input, shape index: {}]
  %s7 = inlined_call_operand.hbm [shape: f32[8,128], index: 7, kind: output, shape index: {}]
  %s8 = sld [smem:[#allocation0]]
  $region54: #{tpu_custom_call.1} parent=0
    _
  %s10 = ssub.s32 1, %s8
  %s11 = scalar_select 0, %s10, %s8
  $region1: #{tpu_custom_call.1} parent=0
    #allocation2 [shape = 'u8[2048]{0}', space=vmem, size = 0x800, scoped, tag = 'input window, operand 0, single buffered']
    #allocation3 [shape = 's32[1]{0}', space=sflag, size = 0x4, scoped, tag = 'scoped memory for tpu_custom_call.1']
    #allocation4 [shape = 's32[1]{0}', space=sflag, size = 0x4, scoped, tag = 'scoped memory for tpu_custom_call.1']
    #allocation5 [shape = 'u8[32768]{0}', space=vmem, size = 0x8000, scoped, tag = 'input window, operand 1, single buffered']
    #allocation6 [shape = 's32[1]{0}', space=sflag, size = 0x4, scoped, tag = 'scoped memory for tpu_custom_call.1']
    #allocation7 [shape = 'u8[32768]{0}', space=vmem, size = 0x8000, scoped, tag = 'input window, operand 2, single buffered']
    #allocation8 [shape = 'u8[32768]{0}', space=vmem, size = 0x8000, scoped, tag = 'input window, operand 3, single buffered']
    #allocation9 [shape = 's32[1]{0}', space=sflag, size = 0x4, scoped, tag = 'scoped memory for tpu_custom_call.1']
    #allocation10 [shape = 'u8[4096]{0}', space=vmem, size = 0x1000, scoped, tag = 'output window, operand 0, single buffered']
    %12 = vsyncpa [#allocation3], 0
    %13 = vsyncpa [#allocation6], 0
    %14 = vsyncpa [#allocation9], 0
    %15 = vsyncpa [#allocation4], 0
    // Predicated region
    $region2: #{tpu_custom_call.1} parent=1 // pred_check
      _
    $region3: #{tpu_custom_call.1} parent=1 // pred_check_branch
      %17 = sbr.rel (0) target = $region5
    $region4: #{tpu_custom_call.1} parent=1 // pred_region
      %s19 = ssub.s32 64, 64
      %20 = vsyncadd [#allocation3], %s19
      %s22 = sshll.u32 [#allocation2], 4
      %s23 = int_to_ptr.vmem [resolvable:$true] %s22
      %25 = dma.hbm_to_vmem [thread:$0]  %s0, 64, %s23, [#allocation3]
    $region5: #{tpu_custom_call.1} parent=1 // pred_fallthru
      _
    // Predicated region
    $region6: #{tpu_custom_call.1} parent=1 // pred_check
      _
    $region7: #{tpu_custom_call.1} parent=1 // pred_check_branch
      %27 = sbr.rel (0) target = $region9
    $region8: #{tpu_custom_call.1} parent=1 // pred_region
      %s29 = ssub.s32 1024, 1024
      %30 = vsyncadd [#allocation6], %s29
      %s31 = sshll.u32 [#allocation5], 4
      %s32 = int_to_ptr.vmem [resolvable:$true] %s31
      %37 = dma.hbm_to_vmem [thread:$0]  %s1, 1024, %s32, [#allocation6], 64, 64, 4
    $region9: #{tpu_custom_call.1} parent=1 // pred_fallthru
      _
    // Predicated region
    $region10: #{tpu_custom_call.1} parent=1 // pred_check
      _
    $region11: #{tpu_custom_call.1} parent=1 // pred_check_branch
      %39 = sbr.rel (0) target = $region13
    $region12: #{tpu_custom_call.1} parent=1 // pred_region
      %s41 = ssub.s32 1024, 1024
      %42 = vsyncadd [#allocation6], %s41
      %s43 = sshll.u32 [#allocation7], 4
      %s44 = int_to_ptr.vmem [resolvable:$true] %s43
      %49 = dma.hbm_to_vmem [thread:$0]  %s2, 1024, %s44, [#allocation6], 64, 64, 4
    $region13: #{tpu_custom_call.1} parent=1 // pred_fallthru
      _
    // Predicated region
    $region14: #{tpu_custom_call.1} parent=1 // pred_check
      _
    $region15: #{tpu_custom_call.1} parent=1 // pred_check_branch
      %51 = sbr.rel (0) target = $region17
    $region16: #{tpu_custom_call.1} parent=1 // pred_region
      %s53 = ssub.s32 1024, 1024
      %54 = vsyncadd [#allocation9], %s53
      %s55 = sshll.u32 [#allocation8], 4
      %s56 = int_to_ptr.vmem [resolvable:$true] %s55
      %61 = dma.hbm_to_vmem [thread:$0]  %s3, 1024, %s56, [#allocation9], 64, 64, 4
    $region17: #{tpu_custom_call.1} parent=1 // pred_fallthru
      _
    // Predicated region
    $region18: #{tpu_custom_call.1} parent=1 // pred_check
      _
    $region19: #{tpu_custom_call.1} parent=1 // pred_check_branch
      %63 = sbr.rel (0) target = $region21
    $region20: #{tpu_custom_call.1} parent=1 // pred_region
      _
    $region21: #{tpu_custom_call.1} parent=1 // pred_fallthru
      _
    // Predicated region
    $region22: #{tpu_custom_call.1} parent=1 // pred_check
      _
    $region23: #{tpu_custom_call.1} parent=1 // pred_check_branch
      %65 = sbr.rel (0) target = $region25
    $region24: #{tpu_custom_call.1} parent=1 // pred_region
      _
    $region25: #{tpu_custom_call.1} parent=1 // pred_fallthru
      _
    // Predicated region
    $region26: #{tpu_custom_call.1} parent=1 // pred_check
      _
    $region27: #{tpu_custom_call.1} parent=1 // pred_check_branch
      %67 = sbr.rel (0) target = $region29
    $region28: #{tpu_custom_call.1} parent=1 // pred_region
      _
    $region29: #{tpu_custom_call.1} parent=1 // pred_fallthru
      _
    // Predicated region
    $region30: #{tpu_custom_call.1} parent=1 // pred_check
      _
    $region31: #{tpu_custom_call.1} parent=1 // pred_check_branch
      %69 = sbr.rel (0) target = $region33
    $region32: #{tpu_custom_call.1} parent=1 // pred_region
      %70 = dma.done [#allocation3], 64
    $region33: #{tpu_custom_call.1} parent=1 // pred_fallthru
      _
    // Predicated region
    $region34: #{tpu_custom_call.1} parent=1 // pred_check
      _
    $region35: #{tpu_custom_call.1} parent=1 // pred_check_branch
      %72 = sbr.rel (0) target = $region37
    $region36: #{tpu_custom_call.1} parent=1 // pred_region
      %73 = dma.done [#allocation6], 1024
    $region37: #{tpu_custom_call.1} parent=1 // pred_fallthru
      _
    // Predicated region
    $region38: #{tpu_custom_call.1} parent=1 // pred_check
      _
    $region39: #{tpu_custom_call.1} parent=1 // pred_check_branch
      %75 = sbr.rel (0) target = $region41
    $region40: #{tpu_custom_call.1} parent=1 // pred_region
      %76 = dma.done [#allocation6], 1024
    $region41: #{tpu_custom_call.1} parent=1 // pred_fallthru
      _
    // Predicated region
    $region42: #{tpu_custom_call.1} parent=1 // pred_check
      _
    $region43: #{tpu_custom_call.1} parent=1 // pred_check_branch
      %78 = sbr.rel (0) target = $region45
    $region44: #{tpu_custom_call.1} parent=1 // pred_region
      %79 = dma.done [#allocation9], 1024
    $region45: #{tpu_custom_call.1} parent=1 // pred_fallthru
      _
    %v81 = vld [vmem:[#allocation2] sm:$0xf]
    %v82 = vld [vmem:[#allocation5] sm:$0xf]
    %v83 = vld [vmem:[#allocation5 + $0x4] sm:$0xf]
    %v84 = vld [vmem:[#allocation5 + $0x8] sm:$0xf]
    %v85 = vld [vmem:[#allocation5 + $0xc] sm:$0xf]
    %v86 = vld [vmem:[#allocation5 + $0x10] sm:$0xf]
    %v87 = vld [vmem:[#allocation5 + $0x14] sm:$0xf]
    %v88 = vld [vmem:[#allocation5 + $0x18] sm:$0xf]
    %v89 = vld [vmem:[#allocation5 + $0x1c] sm:$0xf]
    %v90 = vld [vmem:[#allocation5 + $0x20] sm:$0xf]
    %v91 = vld [vmem:[#allocation5 + $0x24] sm:$0xf]
    %v92 = vld [vmem:[#allocation5 + $0x28] sm:$0xf]
    %v93 = vld [vmem:[#allocation5 + $0x2c] sm:$0xf]
    %v94 = vld [vmem:[#allocation5 + $0x30] sm:$0xf]
    %v95 = vld [vmem:[#allocation5 + $0x34] sm:$0xf]
    %v96 = vld [vmem:[#allocation5 + $0x38] sm:$0xf]
    %v97 = vld [vmem:[#allocation5 + $0x3c] sm:$0xf]
    %v98 = vld [vmem:[%s4] sm:$0x1]
    %v100 = vlaneseq
    %v101 = vshrl.u32 %v100, 7
    %v102 = vsub.s32 0, %v101
    %v103 = vrot.slane %v98, %v102
    %v121 = vunpack.c.l.b16 %v82
    %v122 = vunpack.c.l.b16 %v83
    %v123 = vunpack.c.l.b16 %v84
    %v124 = vunpack.c.l.b16 %v85
    %v125 = vunpack.c.l.b16 %v86
    %v126 = vunpack.c.l.b16 %v87
    %v127 = vunpack.c.l.b16 %v88
    %v128 = vunpack.c.l.b16 %v89
    %v129 = vunpack.c.l.b16 %v90
    %v130 = vunpack.c.l.b16 %v91
    %v131 = vunpack.c.l.b16 %v92
    %v132 = vunpack.c.l.b16 %v93
    %v133 = vunpack.c.l.b16 %v94
    %v134 = vunpack.c.l.b16 %v95
    %v135 = vunpack.c.l.b16 %v96
    %v136 = vunpack.c.l.b16 %v97
    %v137 = vpack.c.b16 %v122, %v121
    %v138 = vpack.c.b16 %v124, %v123
    %v139 = vpack.c.b16 %v126, %v125
    %v140 = vpack.c.b16 %v128, %v127
    %v141 = vpack.c.b16 %v130, %v129
    %v142 = vpack.c.b16 %v132, %v131
    %v143 = vpack.c.b16 %v134, %v133
    %v144 = vpack.c.b16 %v136, %v135
    %153 = vmatprep.subr.bf16.mxu0 0
    %154 = vmatpush1.bf16.msra.mxu0 %v137
    %155 = vmatprep.subr.bf16.mxu0 0
    %156 = vmatpush1.bf16.msra.mxu0 %v138
    %157 = vmatprep.subr.bf16.mxu0 0
    %158 = vmatpush1.bf16.msra.mxu0 %v139
    %159 = vmatprep.subr.bf16.mxu0 0
    %160 = vmatpush1.bf16.msra.mxu0 %v140
    %161 = vmatprep.subr.bf16.mxu0 0
    %162 = vmatpush1.bf16.msra.mxu0 %v141
    %163 = vmatprep.subr.bf16.mxu0 0
    %164 = vmatpush1.bf16.msra.mxu0 %v142
    %165 = vmatprep.subr.bf16.mxu0 0
    %166 = vmatpush1.bf16.msra.mxu0 %v143
    %167 = vmatprep.subr.bf16.mxu0 0
    %168 = vmatpush1.bf16.msra.mxu0 %v144
    %169 = vmatprep.subr.bf16.mxu0 0
    %170 = vmatpush1.bf16.msra.mxu0 0
    %171 = vmatprep.subr.bf16.mxu0 0
    %172 = vmatpush1.bf16.msra.mxu0 0
    %173 = vmatprep.subr.bf16.mxu0 0
    %174 = vmatpush1.bf16.msra.mxu0 0
    %175 = vmatprep.subr.bf16.mxu0 0
    %176 = vmatpush1.bf16.msra.mxu0 0
    %177 = vmatprep.subr.bf16.mxu0 0
    %178 = vmatpush1.bf16.msra.mxu0 0
    %179 = vmatprep.subr.bf16.mxu0 0
    %180 = vmatpush1.bf16.msra.mxu0 0
    %181 = vmatprep.subr.bf16.mxu0 0
    %182 = vmatpush1.bf16.msra.mxu0 0
    %183 = vmatprep.subr.bf16.mxu0 0
    %184 = vmatpush1.bf16.msra.mxu0 0
    %185 = vmatprep.mubr.bf16.mxu0 0
    %186 = vmatmul.mubr.bf16.gmra.mrb[0].mxu0 %v81
    %v187 = vpop.f32.mrb[0].mxu0
    %v188 = vadd.f32 %v103, %v187
    %v189 = vpop.f32.mrb[0].mxu0
    %v190 = vpop.f32.mrb[0].mxu0
    %v191 = vpop.f32.mrb[0].mxu0
    %192 = vdwg.mxu0
    %v193 = vmin.f32 %v188, 20.0
    %v194 = vmul.f32 %v193, 1.442695
    %v195 = vpow.pop %v194
    %v196 = vadd.f32 %v195, 2.0
    %v197 = vmul.f32 %v195, %v196
    %v198 = vmul.f32 %v188, %v197
    %v199 = vadd.f32 %v197, 2.0
    %v200 = vrcp.pop %v199
    %v201 = vmul.f32 %v198, %v200
    %vm202 = vcmp.gt.f32.partialorder %v188, 20.0
    %v203 = vsel %vm202, %v188, %v201
    %v204 = vpack.c.bf16 %v203, %v203
    %v205 = vld [vmem:[#allocation7] sm:$0xf]
    %v206 = vld [vmem:[#allocation7 + $0x4] sm:$0xf]
    %v207 = vld [vmem:[#allocation7 + $0x8] sm:$0xf]
    %v208 = vld [vmem:[#allocation7 + $0xc] sm:$0xf]
    %v209 = vld [vmem:[#allocation7 + $0x10] sm:$0xf]
    %v210 = vld [vmem:[#allocation7 + $0x14] sm:$0xf]
    %v211 = vld [vmem:[#allocation7 + $0x18] sm:$0xf]
    %v212 = vld [vmem:[#allocation7 + $0x1c] sm:$0xf]
    %v213 = vld [vmem:[#allocation7 + $0x20] sm:$0xf]
    %v214 = vld [vmem:[#allocation7 + $0x24] sm:$0xf]
    %v215 = vld [vmem:[#allocation7 + $0x28] sm:$0xf]
    %v216 = vld [vmem:[#allocation7 + $0x2c] sm:$0xf]
    %v217 = vld [vmem:[#allocation7 + $0x30] sm:$0xf]
    %v218 = vld [vmem:[#allocation7 + $0x34] sm:$0xf]
    %v219 = vld [vmem:[#allocation7 + $0x38] sm:$0xf]
    %v220 = vld [vmem:[#allocation7 + $0x3c] sm:$0xf]
    %v221 = vld [vmem:[%s5] sm:$0x1]
    %v223 = vlaneseq
    %v224 = vshrl.u32 %v223, 7
    %v225 = vsub.s32 0, %v224
    %v226 = vrot.slane %v221, %v225
    %v244 = vunpack.c.l.b16 %v205
    %v245 = vunpack.c.l.b16 %v206
    %v246 = vunpack.c.l.b16 %v207
    %v247 = vunpack.c.l.b16 %v208
    %v248 = vunpack.c.l.b16 %v209
    %v249 = vunpack.c.l.b16 %v210
    %v250 = vunpack.c.l.b16 %v211
    %v251 = vunpack.c.l.b16 %v212
    %v252 = vunpack.c.l.b16 %v213
    %v253 = vunpack.c.l.b16 %v214
    %v254 = vunpack.c.l.b16 %v215
    %v255 = vunpack.c.l.b16 %v216
    %v256 = vunpack.c.l.b16 %v217
    %v257 = vunpack.c.l.b16 %v218
    %v258 = vunpack.c.l.b16 %v219
    %v259 = vunpack.c.l.b16 %v220
    %v260 = vpack.c.b16 %v245, %v244
    %v261 = vpack.c.b16 %v247, %v246
    %v262 = vpack.c.b16 %v249, %v248
    %v263 = vpack.c.b16 %v251, %v250
    %v264 = vpack.c.b16 %v253, %v252
    %v265 = vpack.c.b16 %v255, %v254
    %v266 = vpack.c.b16 %v257, %v256
    %v267 = vpack.c.b16 %v259, %v258
    %276 = vmatprep.subr.bf16.mxu0 0
    %277 = vmatpush1.bf16.msra.mxu0 %v260
    %278 = vmatprep.subr.bf16.mxu0 0
    %279 = vmatpush1.bf16.msra.mxu0 %v261
    %280 = vmatprep.subr.bf16.mxu0 0
    %281 = vmatpush1.bf16.msra.mxu0 %v262
    %282 = vmatprep.subr.bf16.mxu0 0
    %283 = vmatpush1.bf16.msra.mxu0 %v263
    %284 = vmatprep.subr.bf16.mxu0 0
    %285 = vmatpush1.bf16.msra.mxu0 %v264
    %286 = vmatprep.subr.bf16.mxu0 0
    %287 = vmatpush1.bf16.msra.mxu0 %v265
    %288 = vmatprep.subr.bf16.mxu0 0
    %289 = vmatpush1.bf16.msra.mxu0 %v266
    %290 = vmatprep.subr.bf16.mxu0 0
    %291 = vmatpush1.bf16.msra.mxu0 %v267
    %292 = vmatprep.subr.bf16.mxu0 0
    %293 = vmatpush1.bf16.msra.mxu0 0
    %294 = vmatprep.subr.bf16.mxu0 0
    %295 = vmatpush1.bf16.msra.mxu0 0
    %296 = vmatprep.subr.bf16.mxu0 0
    %297 = vmatpush1.bf16.msra.mxu0 0
    %298 = vmatprep.subr.bf16.mxu0 0
    %299 = vmatpush1.bf16.msra.mxu0 0
    %300 = vmatprep.subr.bf16.mxu0 0
    %301 = vmatpush1.bf16.msra.mxu0 0
    %302 = vmatprep.subr.bf16.mxu0 0
    %303 = vmatpush1.bf16.msra.mxu0 0
    %304 = vmatprep.subr.bf16.mxu0 0
    %305 = vmatpush1.bf16.msra.mxu0 0
    %306 = vmatprep.subr.bf16.mxu0 0
    %307 = vmatpush1.bf16.msra.mxu0 0
    %308 = vmatprep.mubr.bf16.mxu0 0
    %309 = vmatmul.mubr.bf16.gmra.mrb[0].mxu0 %v204
    %v310 = vpop.f32.mrb[0].mxu0
    %v311 = vadd.f32 %v226, %v310
    %v312 = vpop.f32.mrb[0].mxu0
    %v313 = vpop.f32.mrb[0].mxu0
    %v314 = vpop.f32.mrb[0].mxu0
    %315 = vdwg.mxu0
    %v316 = vmin.f32 %v311, 20.0
    %v317 = vmul.f32 %v316, 1.442695
    %v318 = vpow.pop %v317
    %v319 = vadd.f32 %v318, 2.0
    %v320 = vmul.f32 %v318, %v319
    %v321 = vmul.f32 %v311, %v320
    %v322 = vadd.f32 %v320, 2.0
    %v323 = vrcp.pop %v322
    %v324 = vmul.f32 %v321, %v323
    %vm325 = vcmp.gt.f32.partialorder %v311, 20.0
    %v326 = vsel %vm325, %v311, %v324
    %v327 = vpack.c.bf16 %v326, %v326
    %v328 = vld [vmem:[#allocation8] sm:$0xf]
    %v329 = vld [vmem:[#allocation8 + $0x4] sm:$0xf]
    %v330 = vld [vmem:[#allocation8 + $0x8] sm:$0xf]
    %v331 = vld [vmem:[#allocation8 + $0xc] sm:$0xf]
    %v332 = vld [vmem:[#allocation8 + $0x10] sm:$0xf]
    %v333 = vld [vmem:[#allocation8 + $0x14] sm:$0xf]
    %v334 = vld [vmem:[#allocation8 + $0x18] sm:$0xf]
    %v335 = vld [vmem:[#allocation8 + $0x1c] sm:$0xf]
    %v336 = vld [vmem:[#allocation8 + $0x20] sm:$0xf]
    %v337 = vld [vmem:[#allocation8 + $0x24] sm:$0xf]
    %v338 = vld [vmem:[#allocation8 + $0x28] sm:$0xf]
    %v339 = vld [vmem:[#allocation8 + $0x2c] sm:$0xf]
    %v340 = vld [vmem:[#allocation8 + $0x30] sm:$0xf]
    %v341 = vld [vmem:[#allocation8 + $0x34] sm:$0xf]
    %v342 = vld [vmem:[#allocation8 + $0x38] sm:$0xf]
    %v343 = vld [vmem:[#allocation8 + $0x3c] sm:$0xf]
    %v344 = vld [vmem:[%s6] sm:$0x1]
    %v346 = vlaneseq
    %v347 = vshrl.u32 %v346, 7
    %v348 = vsub.s32 0, %v347
    %v349 = vrot.slane %v344, %v348
    %v367 = vunpack.c.l.b16 %v328
    %v368 = vunpack.c.l.b16 %v329
    %v369 = vunpack.c.l.b16 %v330
    %v370 = vunpack.c.l.b16 %v331
    %v371 = vunpack.c.l.b16 %v332
    %v372 = vunpack.c.l.b16 %v333
    %v373 = vunpack.c.l.b16 %v334
    %v374 = vunpack.c.l.b16 %v335
    %v375 = vunpack.c.l.b16 %v336
    %v376 = vunpack.c.l.b16 %v337
    %v377 = vunpack.c.l.b16 %v338
    %v378 = vunpack.c.l.b16 %v339
    %v379 = vunpack.c.l.b16 %v340
    %v380 = vunpack.c.l.b16 %v341
    %v381 = vunpack.c.l.b16 %v342
    %v382 = vunpack.c.l.b16 %v343
    %v383 = vpack.c.b16 %v368, %v367
    %v384 = vpack.c.b16 %v370, %v369
    %v385 = vpack.c.b16 %v372, %v371
    %v386 = vpack.c.b16 %v374, %v373
    %v387 = vpack.c.b16 %v376, %v375
    %v388 = vpack.c.b16 %v378, %v377
    %v389 = vpack.c.b16 %v380, %v379
    %v390 = vpack.c.b16 %v382, %v381
    %399 = vmatprep.subr.bf16.mxu0 0
    %400 = vmatpush1.bf16.msra.mxu0 %v383
    %401 = vmatprep.subr.bf16.mxu0 0
    %402 = vmatpush1.bf16.msra.mxu0 %v384
    %403 = vmatprep.subr.bf16.mxu0 0
    %404 = vmatpush1.bf16.msra.mxu0 %v385
    %405 = vmatprep.subr.bf16.mxu0 0
    %406 = vmatpush1.bf16.msra.mxu0 %v386
    %407 = vmatprep.subr.bf16.mxu0 0
    %408 = vmatpush1.bf16.msra.mxu0 %v387
    %409 = vmatprep.subr.bf16.mxu0 0
    %410 = vmatpush1.bf16.msra.mxu0 %v388
    %411 = vmatprep.subr.bf16.mxu0 0
    %412 = vmatpush1.bf16.msra.mxu0 %v389
    %413 = vmatprep.subr.bf16.mxu0 0
    %414 = vmatpush1.bf16.msra.mxu0 %v390
    %415 = vmatprep.subr.bf16.mxu0 0
    %416 = vmatpush1.bf16.msra.mxu0 0
    %417 = vmatprep.subr.bf16.mxu0 0
    %418 = vmatpush1.bf16.msra.mxu0 0
    %419 = vmatprep.subr.bf16.mxu0 0
    %420 = vmatpush1.bf16.msra.mxu0 0
    %421 = vmatprep.subr.bf16.mxu0 0
    %422 = vmatpush1.bf16.msra.mxu0 0
    %423 = vmatprep.subr.bf16.mxu0 0
    %424 = vmatpush1.bf16.msra.mxu0 0
    %425 = vmatprep.subr.bf16.mxu0 0
    %426 = vmatpush1.bf16.msra.mxu0 0
    %427 = vmatprep.subr.bf16.mxu0 0
    %428 = vmatpush1.bf16.msra.mxu0 0
    %429 = vmatprep.subr.bf16.mxu0 0
    %430 = vmatpush1.bf16.msra.mxu0 0
    %431 = vmatprep.mubr.bf16.mxu0 0
    %432 = vmatmul.mubr.bf16.gmra.mrb[0].mxu0 %v327
    %v433 = vpop.f32.mrb[0].mxu0
    %v434 = vadd.f32 %v349, %v433
    %v435 = vpop.f32.mrb[0].mxu0
    %v436 = vpop.f32.mrb[0].mxu0
    %v437 = vpop.f32.mrb[0].mxu0
    %438 = vdwg.mxu0
    %439 = vst [vmem:[#allocation10] sm:$0xff] %v434
    // Predicated region
    $region46: #{tpu_custom_call.1} parent=1 // pred_check
      _
    $region47: #{tpu_custom_call.1} parent=1 // pred_check_branch
      %441 = sbr.rel (0) target = $region49
    $region48: #{tpu_custom_call.1} parent=1 // pred_region
      %s443 = ssub.s32 128, 128
      %444 = vsyncadd [#allocation4], %s443
      %s446 = sshll.u32 [#allocation10], 4
      %s447 = int_to_ptr.vmem [resolvable:$true] %s446
      %449 = dma.vmem_to_hbm [thread:$0]  %s447, 128, %s7, [#allocation4]
    $region49: #{tpu_custom_call.1} parent=1 // pred_fallthru
      _
    // Predicated region
    $region50: #{tpu_custom_call.1} parent=1 // pred_check
      _
    $region51: #{tpu_custom_call.1} parent=1 // pred_check_branch
      %451 = sbr.rel (0) target = $region53
    $region52: #{tpu_custom_call.1} parent=1 // pred_region
      %452 = dma.done [#allocation4], 128
    $region53: #{tpu_custom_call.1} parent=1 // pred_fallthru
      _
    %453 = vsyncpa [#allocation3], 1
    %454 = vsyncpa [#allocation6], 1
    %455 = vsyncpa [#allocation9], 1
    %456 = vsyncpa [#allocation4], 1

</llo_original>
